<compile_context>
chip_gen: v7x
topology: tpu7x:2x2x1
jax: 0.10.0
libtpu: 0.0.40
codegen_flags: <defaults>
</compile_context>

<pallas_src>
import jax
import jax.numpy as jnp
from jax.experimental import pallas as pl
from jax.experimental.pallas import tpu as pltpu  # noqa: F401  (TPU backend)

B = 8          # batch
D_IN = 32      # input feature dim
HID = 64       # hidden dim of embedding net
EMB = 32       # embedding dim
EPS = 1e-8     # torch.nn.functional.cosine_similarity default eps

LANES = 128    # lane-padded width of the parameter slab / activations
# Row layout of the packed parameter slab (all offsets sublane (8)-aligned):
W1_R0 = 0                    # rows [0, 32)   : w1  (D_IN, HID) in cols [0, HID)
B1_R0 = W1_R0 + D_IN         # row  32        : b1  in cols [0, HID)
W2_R0 = 40                   # rows [40, 168) : w2  (HID, EMB) in cols [0, EMB), rows >= HID are zero
B2_R0 = W2_R0 + LANES        # row  168       : b2  in cols [0, EMB)
P_ROWS = 176                 # total slab rows (multiple of 8)


def pack_params(w1, b1, w2, b2):
    """Pack all weights/biases into one zero-padded (P_ROWS, 128) f32 slab (done once)."""
    P = jnp.zeros((P_ROWS, LANES), jnp.float32)
    P = P.at[W1_R0:W1_R0 + D_IN, 0:HID].set(w1)
    P = P.at[B1_R0, 0:HID].set(b1.reshape(HID))
    P = P.at[W2_R0:W2_R0 + HID, 0:EMB].set(w2)
    P = P.at[B2_R0, 0:EMB].set(b2.reshape(EMB))
    return P


def _siamese_kernel(a_ref, p_ref, n_ref, params_ref, out_ref):
    # Stack the three (B, D_IN) inputs in VMEM: the embedding MLP then runs as
    # exactly 2 MXU matmuls for all three branches.
    x = jnp.concatenate([a_ref[...], p_ref[...], n_ref[...]], axis=0)  # (3B, D_IN)

    # Static, sublane-aligned slices of the packed parameter slab (free).
    w1p = params_ref[W1_R0:W1_R0 + D_IN, :]      # (D_IN, 128), cols >= HID are zero
    b1p = params_ref[B1_R0:B1_R0 + 1, :]         # (1, 128)
    w2p = params_ref[W2_R0:W2_R0 + LANES, :]     # (128, 128), rows >= HID / cols >= EMB zero
    b2p = params_ref[B2_R0:B2_R0 + 1, :]         # (1, 128)

    # Embedding MLP (lane-dense; padded lanes stay exactly zero through ReLU).
    h = jnp.dot(x, w1p, preferred_element_type=jnp.float32) + b1p
    h = jnp.maximum(h, 0.0)                                     # (3B, 128)
    e = jnp.dot(h, w2p, preferred_element_type=jnp.float32) + b2p  # (3B, 128), cols >= EMB == 0

    ea = e[0 * B:1 * B, :]
    ep = e[1 * B:2 * B, :]
    en = e[2 * B:3 * B, :]

    # One fused cross-lane reduction for all 5 row sums (2 dots + 3 squared norms).
    prods = jnp.concatenate([ea * ep, ea * en, ea * ea, ep * ep, en * en], axis=0)  # (5B, 128)
    red = jnp.sum(prods, axis=-1, keepdims=True)                                    # (5B, 1)

    dot_ap = red[0 * B:1 * B]
    dot_an = red[1 * B:2 * B]
    na2 = red[2 * B:3 * B]
    np2 = red[3 * B:4 * B]
    nn2 = red[4 * B:5 * B]

    # cos = dot / (max(||u||, eps) * max(||v||, eps))  ==  dot * rsqrt(max(nu2,eps^2) * max(nv2,eps^2))
    na2c = jnp.maximum(na2, EPS * EPS)
    np2c = jnp.maximum(np2, EPS * EPS)
    nn2c = jnp.maximum(nn2, EPS * EPS)
    ap = dot_ap * jax.lax.rsqrt(na2c * np2c)
    an = dot_an * jax.lax.rsqrt(na2c * nn2c)

    # Single packed (B, 2) output writeback.
    out_ref[...] = jnp.concatenate([ap, an], axis=-1)


def siamese_forward(anchor, positive, negative, params):
    """Returns (ap_similarity, an_similarity), each of shape (B,) float32."""
    full = lambda shape: pl.BlockSpec(shape, lambda: tuple(0 for _ in shape))
    out = pl.pallas_call(
        _siamese_kernel,
        out_shape=jax.ShapeDtypeStruct((B, 2), jnp.float32),
        grid=(),  # ~100 KB total resident data: single-shot, no tiling needed
        in_specs=[
            full((B, D_IN)), full((B, D_IN)), full((B, D_IN)),
            full((P_ROWS, LANES)),
        ],
        out_specs=full((B, 2)),
    )(anchor, positive, negative, params)
    return out[:, 0], out[:, 1]


def _reference(anchor, positive, negative, w1, b1, w2, b2):
    def embed(x):
        h = jnp.maximum(x @ w1 + b1, 0.0)
        return h @ w2 + b2

    def cosine(u, v):
        nu = jnp.maximum(jnp.sqrt(jnp.sum(u * u, axis=-1)), EPS)
        nv = jnp.maximum(jnp.sqrt(jnp.sum(v * v, axis=-1)), EPS)
        return jnp.sum(u * v, axis=-1) / (nu * nv)

    ea, ep, en = embed(anchor), embed(positive), embed(negative)
    return cosine(ea, ep), cosine(ea, en)


if __name__ == "__main__":
    key = jax.random.PRNGKey(0)
    ka, kp, kn, kw1, kb1, kw2, kb2 = jax.random.split(key, 7)

    anchor = jax.random.normal(ka, (B, D_IN), dtype=jnp.float32)
    positive = jax.random.normal(kp, (B, D_IN), dtype=jnp.float32)
    negative = jax.random.normal(kn, (B, D_IN), dtype=jnp.float32)

    # Torch-Linear-style uniform init (±1/sqrt(fan_in)), stored pre-transposed as [in, out].
    lim1 = 1.0 / (D_IN ** 0.5)
    lim2 = 1.0 / (HID ** 0.5)
    w1 = jax.random.uniform(kw1, (D_IN, HID), jnp.float32, -lim1, lim1)
    b1 = jax.random.uniform(kb1, (HID,), jnp.float32, -lim1, lim1)
    w2 = jax.random.uniform(kw2, (HID, EMB), jnp.float32, -lim2, lim2)
    b2 = jax.random.uniform(kb2, (EMB,), jnp.float32, -lim2, lim2)

    # Pack the 4 parameter tensors into one DMA-friendly slab (done once, outside the hot path).
    params = pack_params(w1, b1, w2, b2)

    ap_sim, an_sim = jax.jit(siamese_forward)(anchor, positive, negative, params)
    jax.block_until_ready((ap_sim, an_sim))

    ap_ref, an_ref = _reference(anchor, positive, negative, w1, b1, w2, b2)
    assert ap_sim.shape == (B,) and an_sim.shape == (B,)
    # Exact rsqrt (no approx reciprocal) -> tolerance tightened vs. previous 2e-3.
    assert jnp.allclose(ap_sim, ap_ref, atol=5e-4, rtol=5e-4)
    assert jnp.allclose(an_sim, an_ref, atol=5e-4, rtol=5e-4)

    print("KERNEL_OK")
</pallas_src>

<mosaic_0001>
module attributes {stable_mosaic.version = 11 : i64} {
  func.func @_siamese_kernel(%arg0: memref<8x32xf32, #tpu.memory_space<vmem>>, %arg1: memref<8x32xf32, #tpu.memory_space<vmem>>, %arg2: memref<8x32xf32, #tpu.memory_space<vmem>>, %arg3: memref<176x128xf32, #tpu.memory_space<vmem>>, %arg4: memref<8x2xf32, #tpu.memory_space<vmem>>) attributes {dimension_semantics = [], scalar_prefetch = 0 : i64, scratch_operands = 0 : i64, tpu.core_type = #tpu.core_type<tc>} {
    %c0 = arith.constant 0 : index
    %c0_0 = arith.constant 0 : index
    %0 = vector.load %arg0[%c0, %c0_0] : memref<8x32xf32, #tpu.memory_space<vmem>>, vector<8x32xf32>
    %c0_1 = arith.constant 0 : index
    %c0_2 = arith.constant 0 : index
    %1 = vector.load %arg1[%c0_1, %c0_2] : memref<8x32xf32, #tpu.memory_space<vmem>>, vector<8x32xf32>
    %c0_3 = arith.constant 0 : index
    %c0_4 = arith.constant 0 : index
    %2 = vector.load %arg2[%c0_3, %c0_4] : memref<8x32xf32, #tpu.memory_space<vmem>>, vector<8x32xf32>
    %3 = tpu.concatenate %0, %1, %2 in 0 : vector<8x32xf32>, vector<8x32xf32>, vector<8x32xf32> -> vector<24x32xf32>
    %c0_5 = arith.constant 0 : index
    %c0_6 = arith.constant 0 : index
    %4 = vector.load %arg3[%c0_5, %c0_6] : memref<176x128xf32, #tpu.memory_space<vmem>>, vector<32x128xf32>
    %c32 = arith.constant 32 : index
    %c0_7 = arith.constant 0 : index
    %5 = vector.load %arg3[%c32, %c0_7] : memref<176x128xf32, #tpu.memory_space<vmem>>, vector<1x128xf32>
    %c40 = arith.constant 40 : index
    %c0_8 = arith.constant 0 : index
    %6 = vector.load %arg3[%c40, %c0_8] : memref<176x128xf32, #tpu.memory_space<vmem>>, vector<128x128xf32>
    %c168 = arith.constant 168 : index
    %c0_9 = arith.constant 0 : index
    %7 = vector.load %arg3[%c168, %c0_9] : memref<176x128xf32, #tpu.memory_space<vmem>>, vector<1x128xf32>
    %cst = arith.constant dense<0.000000e+00> : vector<24x128xf32>
    %8 = tpu.matmul %3, %4, %cst {dimension_numbers = #tpu.dot_dimension_numbers<[1], [0], [0], [1], [0, 0, 1, 1], [], []>} : vector<24x32xf32>, vector<32x128xf32>, vector<24x128xf32> -> vector<24x128xf32>
    %9 = vector.broadcast %5 : vector<1x128xf32> to vector<24x128xf32>
    %10 = arith.addf %8, %9 : vector<24x128xf32>
    %cst_10 = arith.constant 0.000000e+00 : f32
    %11 = vector.broadcast %cst_10 : f32 to vector<24x128xf32>
    %12 = arith.maximumf %10, %11 : vector<24x128xf32>
    %cst_11 = arith.constant dense<0.000000e+00> : vector<24x128xf32>
    %13 = tpu.matmul %12, %6, %cst_11 {dimension_numbers = #tpu.dot_dimension_numbers<[1], [0], [0], [1], [0, 0, 1, 1], [], []>} : vector<24x128xf32>, vector<128x128xf32>, vector<24x128xf32> -> vector<24x128xf32>
    %14 = vector.broadcast %7 : vector<1x128xf32> to vector<24x128xf32>
    %15 = arith.addf %13, %14 : vector<24x128xf32>
    %16 = vector.extract_strided_slice %15 {offsets = [0, 0], sizes = [8, 128], strides = [1, 1]} : vector<24x128xf32> to vector<8x128xf32>
    %17 = vector.extract_strided_slice %15 {offsets = [8, 0], sizes = [8, 128], strides = [1, 1]} : vector<24x128xf32> to vector<8x128xf32>
    %18 = vector.extract_strided_slice %15 {offsets = [16, 0], sizes = [8, 128], strides = [1, 1]} : vector<24x128xf32> to vector<8x128xf32>
    %19 = arith.mulf %16, %17 : vector<8x128xf32>
    %20 = arith.mulf %16, %18 : vector<8x128xf32>
    %21 = arith.mulf %16, %16 : vector<8x128xf32>
    %22 = arith.mulf %17, %17 : vector<8x128xf32>
    %23 = arith.mulf %18, %18 : vector<8x128xf32>
    %24 = tpu.concatenate %19, %20, %21, %22, %23 in 0 : vector<8x128xf32>, vector<8x128xf32>, vector<8x128xf32>, vector<8x128xf32>, vector<8x128xf32> -> vector<40x128xf32>
    %cst_12 = arith.constant dense<0.000000e+00> : vector<40xf32>
    %25 = vector.multi_reduction <add>, %24, %cst_12 [1] : vector<40x128xf32> to vector<40xf32>
    %26 = vector.shape_cast %25 : vector<40xf32> to vector<40x1xf32>
    %27 = vector.extract_strided_slice %26 {offsets = [0, 0], sizes = [8, 1], strides = [1, 1]} : vector<40x1xf32> to vector<8x1xf32>
    %28 = vector.extract_strided_slice %26 {offsets = [8, 0], sizes = [8, 1], strides = [1, 1]} : vector<40x1xf32> to vector<8x1xf32>
    %29 = vector.extract_strided_slice %26 {offsets = [16, 0], sizes = [8, 1], strides = [1, 1]} : vector<40x1xf32> to vector<8x1xf32>
    %30 = vector.extract_strided_slice %26 {offsets = [24, 0], sizes = [8, 1], strides = [1, 1]} : vector<40x1xf32> to vector<8x1xf32>
    %31 = vector.extract_strided_slice %26 {offsets = [32, 0], sizes = [8, 1], strides = [1, 1]} : vector<40x1xf32> to vector<8x1xf32>
    %cst_13 = arith.constant 1.000000e-16 : f32
    %32 = vector.broadcast %cst_13 : f32 to vector<8x1xf32>
    %33 = arith.maximumf %29, %32 : vector<8x1xf32>
    %cst_14 = arith.constant 1.000000e-16 : f32
    %34 = vector.broadcast %cst_14 : f32 to vector<8x1xf32>
    %35 = arith.maximumf %30, %34 : vector<8x1xf32>
    %cst_15 = arith.constant 1.000000e-16 : f32
    %36 = vector.broadcast %cst_15 : f32 to vector<8x1xf32>
    %37 = arith.maximumf %31, %36 : vector<8x1xf32>
    %38 = arith.mulf %33, %35 : vector<8x1xf32>
    %39 = math.rsqrt %38 : vector<8x1xf32>
    %40 = arith.mulf %27, %39 : vector<8x1xf32>
    %41 = arith.mulf %33, %37 : vector<8x1xf32>
    %42 = math.rsqrt %41 : vector<8x1xf32>
    %43 = arith.mulf %28, %42 : vector<8x1xf32>
    %44 = tpu.concatenate %40, %43 in 1 : vector<8x1xf32>, vector<8x1xf32> -> vector<8x2xf32>
    %c0_16 = arith.constant 0 : index
    %c0_17 = arith.constant 0 : index
    %45 = vector.load %arg4[%c0_16, %c0_17] : memref<8x2xf32, #tpu.memory_space<vmem>>, vector<8x2xf32>
    tpu.vector_store %arg4[%c0_16, %c0_17], %44 {strides = array<i32>} : memref<8x2xf32, #tpu.memory_space<vmem>>, vector<8x2xf32>,
    return
  }
}

</mosaic_0001>

<llo_original>
// kernel: siamese_forward.1
$region0: #{siamese_forward.1}
  #allocation0 [shape = 'u32[]', space=smem, size = 0x4, offset = 0x4, fixed_abs, tag = 'smem constant byte address 0x4 - core index']
  #allocation1 [shape = 'u32[144,128]{1,0:T(1,128)}', space=vmem, size = 0x12000, scoped, tag = 'internal scratch']
  %s0 = inlined_call_operand.hbm [shape: f32[8,32], index: 0, kind: input, shape index: {}]
  %s1 = inlined_call_operand.hbm [shape: f32[8,32], index: 1, kind: input, shape index: {}]
  %s2 = inlined_call_operand.hbm [shape: f32[8,32], index: 2, kind: input, shape index: {}]
  %s3 = inlined_call_operand.hbm [shape: f32[176,128], index: 3, kind: input, shape index: {}]
  %s4 = inlined_call_operand.vmem [shape: f32[8,2], index: 4, kind: output, shape index: {}]
  %s5 = sld [smem:[#allocation0]]
  $region42: #{siamese_forward.1} parent=0
    _
  %s7 = ssub.s32 1, %s5
  %s8 = scalar_select 0, %s7, %s5
  $region1: #{siamese_forward.1} parent=0
    #allocation2 [shape = 'u8[4096]{0}', space=vmem, size = 0x1000, scoped, tag = 'input window, operand 0, single buffered']
    #allocation3 [shape = 's32[1]{0}', space=sflag, size = 0x4, scoped, tag = 'scoped memory for siamese_forward.1']
    #allocation4 [shape = 'u8[4096]{0}', space=vmem, size = 0x1000, scoped, tag = 'input window, operand 1, single buffered']
    #allocation5 [shape = 's32[1]{0}', space=sflag, size = 0x4, scoped, tag = 'scoped memory for siamese_forward.1']
    #allocation6 [shape = 'u8[4096]{0}', space=vmem, size = 0x1000, scoped, tag = 'input window, operand 2, single buffered']
    #allocation7 [shape = 'u8[90112]{0}', space=vmem, size = 0x16000, scoped, tag = 'input window, operand 3, single buffered']
    #allocation8 [shape = 's32[1]{0}', space=sflag, size = 0x4, scoped, tag = 'scoped memory for siamese_forward.1']
    %9 = vsyncpa [#allocation3], 0
    %10 = vsyncpa [#allocation5], 0
    %11 = vsyncpa [#allocation8], 0
    // Predicated region
    $region2: #{siamese_forward.1} parent=1 // pred_check
      _
    $region3: #{siamese_forward.1} parent=1 // pred_check_branch
      %13 = sbr.rel (0) target = $region5
    $region4: #{siamese_forward.1} parent=1 // pred_region
      %s15 = ssub.s32 128, 128
      %16 = vsyncadd [#allocation3], %s15
      %s18 = sshll.u32 [#allocation2], 4
      %s19 = int_to_ptr.vmem [resolvable:$true] %s18
      %21 = dma.hbm_to_vmem [thread:$0]  %s0, 128, %s19, [#allocation3]
    $region5: #{siamese_forward.1} parent=1 // pred_fallthru
      _
    // Predicated region
    $region6: #{siamese_forward.1} parent=1 // pred_check
      _
    $region7: #{siamese_forward.1} parent=1 // pred_check_branch
      %23 = sbr.rel (0) target = $region9
    $region8: #{siamese_forward.1} parent=1 // pred_region
      %s25 = ssub.s32 128, 128
      %26 = vsyncadd [#allocation5], %s25
      %s28 = sshll.u32 [#allocation4], 4
      %s29 = int_to_ptr.vmem [resolvable:$true] %s28
      %31 = dma.hbm_to_vmem [thread:$0]  %s1, 128, %s29, [#allocation5]
    $region9: #{siamese_forward.1} parent=1 // pred_fallthru
      _
    // Predicated region
    $region10: #{siamese_forward.1} parent=1 // pred_check
      _
    $region11: #{siamese_forward.1} parent=1 // pred_check_branch
      %33 = sbr.rel (0) target = $region13
    $region12: #{siamese_forward.1} parent=1 // pred_region
      %s35 = ssub.s32 128, 128
      %36 = vsyncadd [#allocation5], %s35
      %s38 = sshll.u32 [#allocation6], 4
      %s39 = int_to_ptr.vmem [resolvable:$true] %s38
      %41 = dma.hbm_to_vmem [thread:$0]  %s2, 128, %s39, [#allocation5]
    $region13: #{siamese_forward.1} parent=1 // pred_fallthru
      _
    // Predicated region
    $region14: #{siamese_forward.1} parent=1 // pred_check
      _
    $region15: #{siamese_forward.1} parent=1 // pred_check_branch
      %43 = sbr.rel (0) target = $region17
    $region16: #{siamese_forward.1} parent=1 // pred_region
      %s45 = ssub.s32 2816, 2816
      %46 = vsyncadd [#allocation8], %s45
      %s47 = sshll.u32 [#allocation7], 4
      %s48 = int_to_ptr.vmem [resolvable:$true] %s47
      %53 = dma.hbm_to_vmem [thread:$0]  %s3, 2816, %s48, [#allocation8], 128, 128, 8
    $region17: #{siamese_forward.1} parent=1 // pred_fallthru
      _
    // Predicated region
    $region18: #{siamese_forward.1} parent=1 // pred_check
      _
    $region19: #{siamese_forward.1} parent=1 // pred_check_branch
      %55 = sbr.rel (0) target = $region21
    $region20: #{siamese_forward.1} parent=1 // pred_region
      %56 = dma.done [#allocation3], 128
    $region21: #{siamese_forward.1} parent=1 // pred_fallthru
      _
    // Predicated region
    $region22: #{siamese_forward.1} parent=1 // pred_check
      _
    $region23: #{siamese_forward.1} parent=1 // pred_check_branch
      %58 = sbr.rel (0) target = $region25
    $region24: #{siamese_forward.1} parent=1 // pred_region
      %59 = dma.done [#allocation5], 128
    $region25: #{siamese_forward.1} parent=1 // pred_fallthru
      _
    // Predicated region
    $region26: #{siamese_forward.1} parent=1 // pred_check
      _
    $region27: #{siamese_forward.1} parent=1 // pred_check_branch
      %61 = sbr.rel (0) target = $region29
    $region28: #{siamese_forward.1} parent=1 // pred_region
      %62 = dma.done [#allocation5], 128
    $region29: #{siamese_forward.1} parent=1 // pred_fallthru
      _
    // Predicated region
    $region30: #{siamese_forward.1} parent=1 // pred_check
      _
    $region31: #{siamese_forward.1} parent=1 // pred_check_branch
      %64 = sbr.rel (0) target = $region33
    $region32: #{siamese_forward.1} parent=1 // pred_region
      %65 = dma.done [#allocation8], 2816
    $region33: #{siamese_forward.1} parent=1 // pred_fallthru
      _
    %v66 = vld [vmem:[#allocation2] sm:$0xff]
    %v67 = vld [vmem:[#allocation4] sm:$0xff]
    %v68 = vld [vmem:[#allocation6] sm:$0xff]
    %v69 = vld [vmem:[#allocation7] sm:$0xff]
    %v70 = vld [vmem:[#allocation7 + $0x8] sm:$0xff]
    %v71 = vld [vmem:[#allocation7 + $0x10] sm:$0xff]
    %v72 = vld [vmem:[#allocation7 + $0x18] sm:$0xff]
    %v73 = vld [vmem:[#allocation7 + $0x20] sm:$0x1]
    %v74 = vld [vmem:[#allocation7 + $0x28] sm:$0xff]
    %v75 = vld [vmem:[#allocation7 + $0x30] sm:$0xff]
    %v76 = vld [vmem:[#allocation7 + $0x38] sm:$0xff]
    %v77 = vld [vmem:[#allocation7 + $0x40] sm:$0xff]
    %v78 = vld [vmem:[#allocation7 + $0x48] sm:$0xff]
    %v79 = vld [vmem:[#allocation7 + $0x50] sm:$0xff]
    %v80 = vld [vmem:[#allocation7 + $0x58] sm:$0xff]
    %v81 = vld [vmem:[#allocation7 + $0x60] sm:$0xff]
    %v82 = vld [vmem:[#allocation7 + $0x68] sm:$0xff]
    %v83 = vld [vmem:[#allocation7 + $0x70] sm:$0xff]
    %v84 = vld [vmem:[#allocation7 + $0x78] sm:$0xff]
    %v85 = vld [vmem:[#allocation7 + $0x80] sm:$0xff]
    %v86 = vld [vmem:[#allocation7 + $0x88] sm:$0xff]
    %v87 = vld [vmem:[#allocation7 + $0x90] sm:$0xff]
    %v88 = vld [vmem:[#allocation7 + $0x98] sm:$0xff]
    %v89 = vld [vmem:[#allocation7 + $0xa0] sm:$0xff]
    %v90 = vld [vmem:[#allocation7 + $0xa8] sm:$0x1]
    %v91 = vlaneseq
    %v92 = vshrl.u32 %v91, 7
    %v93 = vsub.s32 0, %v92
    %v94 = vrot.slane %v73, %v93
    %vm95 = vcmask 261120
    %v97 = vsel %vm95, %v66, 0
    %v100 = vsel %vm95, %v67, 0
    %v103 = vsel %vm95, %v68, 0
    %105 = vmatprep.subr.mxu0 0.0
    %106 = vmatpush1.msra.mxu0 %v69
    %107 = vmatprep.subr.mxu0 0.0
    %108 = vmatpush1.msra.mxu0 %v70
    %109 = vmatprep.subr.mxu0 0.0
    %110 = vmatpush1.msra.mxu0 %v71
    %111 = vmatprep.subr.mxu0 0.0
    %112 = vmatpush1.msra.mxu0 %v72
    %113 = vmatprep.subr.mxu0 0.0
    %114 = vmatpush1.msra.mxu0 0.0
    %115 = vmatprep.subr.mxu0 0.0
    %116 = vmatpush1.msra.mxu0 0.0
    %117 = vmatprep.subr.mxu0 0.0
    %118 = vmatpush1.msra.mxu0 0.0
    %119 = vmatprep.subr.mxu0 0.0
    %120 = vmatpush1.msra.mxu0 0.0
    %121 = vmatprep.subr.mxu0 0.0
    %122 = vmatpush1.msra.mxu0 0.0
    %123 = vmatprep.subr.mxu0 0.0
    %124 = vmatpush1.msra.mxu0 0.0
    %125 = vmatprep.subr.mxu0 0.0
    %126 = vmatpush1.msra.mxu0 0.0
    %127 = vmatprep.subr.mxu0 0.0
    %128 = vmatpush1.msra.mxu0 0.0
    %129 = vmatprep.subr.mxu0 0.0
    %130 = vmatpush1.msra.mxu0 0.0
    %131 = vmatprep.subr.mxu0 0.0
    %132 = vmatpush1.msra.mxu0 0.0
    %133 = vmatprep.subr.mxu0 0.0
    %134 = vmatpush1.msra.mxu0 0.0
    %135 = vmatprep.subr.mxu0 0.0
    %136 = vmatpush1.msra.mxu0 0.0
    %137 = vmatprep.subr.mxu0 0.0
    %138 = vmatpush1.msra.mxu0 0.0
    %139 = vmatprep.subr.mxu0 0.0
    %140 = vmatpush1.msra.mxu0 0.0
    %141 = vmatprep.subr.mxu0 0.0
    %142 = vmatpush1.msra.mxu0 0.0
    %143 = vmatprep.subr.mxu0 0.0
    %144 = vmatpush1.msra.mxu0 0.0
    %145 = vmatprep.subr.mxu0 0.0
    %146 = vmatpush1.msra.mxu0 0.0
    %147 = vmatprep.subr.mxu0 0.0
    %148 = vmatpush1.msra.mxu0 0.0
    %149 = vmatprep.subr.mxu0 0.0
    %150 = vmatpush1.msra.mxu0 0.0
    %151 = vmatprep.subr.mxu0 0.0
    %152 = vmatpush1.msra.mxu0 0.0
    %153 = vmatprep.subr.mxu0 0.0
    %154 = vmatpush1.msra.mxu0 0.0
    %155 = vmatprep.subr.mxu0 0.0
    %156 = vmatpush1.msra.mxu0 0.0
    %157 = vmatprep.subr.mxu0 0.0
    %158 = vmatpush1.msra.mxu0 0.0
    %159 = vmatprep.subr.mxu0 0.0
    %160 = vmatpush1.msra.mxu0 0.0
    %161 = vmatprep.subr.mxu0 0.0
    %162 = vmatpush1.msra.mxu0 0.0
    %163 = vmatprep.subr.mxu0 0.0
    %164 = vmatpush1.msra.mxu0 0.0
    %165 = vmatprep.subr.mxu0 0.0
    %166 = vmatpush1.msra.mxu0 0.0
    %167 = vmatprep.subr.mxu0 0.0
    %168 = vmatpush1.msra.mxu0 0.0
    %169 = vmatprep.mubr.f32.mxu0 0.0
    %170 = vmatmul.mubr.f32.gmra.mrb[0].mxu0 %v97
    %v171 = vpop.f32.mrb[0].mxu0
    %v172 = vadd.f32 %v94, %v171
    %v173 = vpop.f32.mrb[0].mxu0
    %174 = vmatprep.mubr.f32.mxu0 0.0
    %175 = vmatmul.mubr.f32.gmra.mrb[0].mxu0 %v100
    %v176 = vpop.f32.mrb[0].mxu0
    %v177 = vadd.f32 %v94, %v176
    %v178 = vpop.f32.mrb[0].mxu0
    %179 = vmatprep.mubr.f32.mxu0 0.0
    %180 = vmatmul.mubr.f32.gmra.mrb[0].mxu0 %v103
    %v181 = vpop.f32.mrb[0].mxu0
    %v182 = vadd.f32 %v94, %v181
    %v183 = vpop.f32.mrb[0].mxu0
    %184 = vdwg.mxu0
    %v185 = vmax.f32 %v172, 0.0
    %v186 = vmax.f32 %v177, 0.0
    %v187 = vmax.f32 %v182, 0.0
    %v188 = vlaneseq
    %v189 = vshrl.u32 %v188, 7
    %v190 = vsub.s32 0, %v189
    %v191 = vrot.slane %v90, %v190
    %192 = vmatprep.subr.mxu0 0.0
    %193 = vmatpush1.msra.mxu0 %v74
    %194 = vmatprep.subr.mxu0 0.0
    %195 = vmatpush1.msra.mxu0 %v75
    %196 = vmatprep.subr.mxu0 0.0
    %197 = vmatpush1.msra.mxu0 %v76
    %198 = vmatprep.subr.mxu0 0.0
    %199 = vmatpush1.msra.mxu0 %v77
    %200 = vmatprep.subr.mxu0 0.0
    %201 = vmatpush1.msra.mxu0 %v78
    %202 = vmatprep.subr.mxu0 0.0
    %203 = vmatpush1.msra.mxu0 %v79
    %204 = vmatprep.subr.mxu0 0.0
    %205 = vmatpush1.msra.mxu0 %v80
    %206 = vmatprep.subr.mxu0 0.0
    %207 = vmatpush1.msra.mxu0 %v81
    %208 = vmatprep.subr.mxu0 0.0
    %209 = vmatpush1.msra.mxu0 %v82
    %210 = vmatprep.subr.mxu0 0.0
    %211 = vmatpush1.msra.mxu0 %v83
    %212 = vmatprep.subr.mxu0 0.0
    %213 = vmatpush1.msra.mxu0 %v84
    %214 = vmatprep.subr.mxu0 0.0
    %215 = vmatpush1.msra.mxu0 %v85
    %216 = vmatprep.subr.mxu0 0.0
    %217 = vmatpush1.msra.mxu0 %v86
    %218 = vmatprep.subr.mxu0 0.0
    %219 = vmatpush1.msra.mxu0 %v87
    %220 = vmatprep.subr.mxu0 0.0
    %221 = vmatpush1.msra.mxu0 %v88
    %222 = vmatprep.subr.mxu0 0.0
    %223 = vmatpush1.msra.mxu0 %v89
    %224 = vmatprep.subr.mxu0 0.0
    %225 = vmatpush1.msra.mxu0 0.0
    %226 = vmatprep.subr.mxu0 0.0
    %227 = vmatpush1.msra.mxu0 0.0
    %228 = vmatprep.subr.mxu0 0.0
    %229 = vmatpush1.msra.mxu0 0.0
    %230 = vmatprep.subr.mxu0 0.0
    %231 = vmatpush1.msra.mxu0 0.0
    %232 = vmatprep.subr.mxu0 0.0
    %233 = vmatpush1.msra.mxu0 0.0
    %234 = vmatprep.subr.mxu0 0.0
    %235 = vmatpush1.msra.mxu0 0.0
    %236 = vmatprep.subr.mxu0 0.0
    %237 = vmatpush1.msra.mxu0 0.0
    %238 = vmatprep.subr.mxu0 0.0
    %239 = vmatpush1.msra.mxu0 0.0
    %240 = vmatprep.subr.mxu0 0.0
    %241 = vmatpush1.msra.mxu0 0.0
    %242 = vmatprep.subr.mxu0 0.0
    %243 = vmatpush1.msra.mxu0 0.0
    %244 = vmatprep.subr.mxu0 0.0
    %245 = vmatpush1.msra.mxu0 0.0
    %246 = vmatprep.subr.mxu0 0.0
    %247 = vmatpush1.msra.mxu0 0.0
    %248 = vmatprep.subr.mxu0 0.0
    %249 = vmatpush1.msra.mxu0 0.0
    %250 = vmatprep.subr.mxu0 0.0
    %251 = vmatpush1.msra.mxu0 0.0
    %252 = vmatprep.subr.mxu0 0.0
    %253 = vmatpush1.msra.mxu0 0.0
    %254 = vmatprep.subr.mxu0 0.0
    %255 = vmatpush1.msra.mxu0 0.0
    %256 = vmatprep.mubr.f32.mxu0 0.0
    %257 = vmatmul.mubr.f32.gmra.mrb[0].mxu0 %v185
    %v258 = vpop.f32.mrb[0].mxu0
    %v259 = vadd.f32 %v191, %v258
    %v260 = vpop.f32.mrb[0].mxu0
    %261 = vmatprep.mubr.f32.mxu0 0.0
    %262 = vmatmul.mubr.f32.gmra.mrb[0].mxu0 %v186
    %v263 = vpop.f32.mrb[0].mxu0
    %v264 = vadd.f32 %v191, %v263
    %v265 = vpop.f32.mrb[0].mxu0
    %266 = vmatprep.mubr.f32.mxu0 0.0
    %267 = vmatmul.mubr.f32.gmra.mrb[0].mxu0 %v187
    %v268 = vpop.f32.mrb[0].mxu0
    %v269 = vadd.f32 %v191, %v268
    %v270 = vpop.f32.mrb[0].mxu0
    %271 = vdwg.mxu0
    %v272 = vmul.f32 %v259, %v264
    %v273 = vmul.f32 %v259, %v269
    %v274 = vmul.f32 %v259, %v259
    %v275 = vmul.f32 %v264, %v264
    %v276 = vmul.f32 %v269, %v269
    %277 = vadd.xlane.f32.xlu0 %v272
    %v278 = vpop.xlane.xlu0 %277
    %279 = vadd.xlane.f32.xlu0 %v273
    %v280 = vpop.xlane.xlu0 %279
    %281 = vadd.xlane.f32.xlu0 %v274
    %v282 = vpop.xlane.xlu0 %281
    %283 = vadd.xlane.f32.xlu0 %v275
    %v284 = vpop.xlane.xlu0 %283
    %285 = vadd.xlane.f32.xlu0 %v276
    %v286 = vpop.xlane.xlu0 %285
    %v287 = vmax.f32 %v282, 1e-16
    %v288 = vmax.f32 %v284, 1e-16
    %v289 = vmax.f32 %v286, 1e-16
    %v290 = vmul.f32 %v287, %v288
    %v291 = vrsqrt.pop %v290
    %v292 = vmul.f32 %v278, %v291
    %v293 = vmul.f32 %v287, %v289
    %v294 = vrsqrt.pop %v293
    %v295 = vmul.f32 %v280, %v294
    %vm296 = vcmask 7168
    %v297 = vsel %vm296, %v292, %v295
    %vm298 = vcmask 15360
    %299 = vst.msk [vmem:[%s4] sm:$0xff] %vm298, %v297
    // Predicated region
    $region34: #{siamese_forward.1} parent=1 // pred_check
      _
    $region35: #{siamese_forward.1} parent=1 // pred_check_branch
      %301 = sbr.rel (0) target = $region37
    $region36: #{siamese_forward.1} parent=1 // pred_region
      _
    $region37: #{siamese_forward.1} parent=1 // pred_fallthru
      _
    // Predicated region
    $region38: #{siamese_forward.1} parent=1 // pred_check
      _
    $region39: #{siamese_forward.1} parent=1 // pred_check_branch
      %303 = sbr.rel (0) target = $region41
    $region40: #{siamese_forward.1} parent=1 // pred_region
      _
    $region41: #{siamese_forward.1} parent=1 // pred_fallthru
      _
    %304 = vsyncpa [#allocation3], 1
    %305 = vsyncpa [#allocation5], 1
    %306 = vsyncpa [#allocation8], 1

</llo_original>
